<compile_context>
chip_gen: v6e
topology: v6e:2x2x1
jax: 0.10.0
libtpu: 0.0.40
codegen_flags: <defaults>
</compile_context>

<pallas_src>
import functools

import jax
import jax.numpy as jnp
from jax.experimental import pallas as pl
from jax.experimental.pallas import tpu as pltpu


def _contrastive_loss_kernel(
    o1_ref, o2_ref, label_ref, out_ref, acc_ref, *, margin, eps, batch, tile
):
    step = pl.program_id(0)

    @pl.when(step == 0)
    def _():
        acc_ref[0, 0] = jnp.float32(0.0)

    o1 = o1_ref[...].astype(jnp.float32)          # (TB, D)
    o2 = o2_ref[...].astype(jnp.float32)          # (TB, D)
    lbl = label_ref[...].astype(jnp.float32)      # (TB, 1)

    diff = o1 - o2 + eps                          # matches torch's eps handling
    sq_sum = jnp.sum(diff * diff, axis=-1, keepdims=True)   # (TB, 1)
    dist = jnp.sqrt(sq_sum)                                  # only for margin term

    pos = (1.0 - lbl) * sq_sum                    # d^2 == sq_sum (skip sqrt^2)
    neg = lbl * jnp.square(jnp.maximum(margin - dist, 0.0))
    per_pair = pos + neg                          # (TB, 1)

    if batch % tile != 0:
        # Mask garbage rows of the final partial tile.
        row = step * tile + jax.lax.broadcasted_iota(jnp.int32, per_pair.shape, 0)
        per_pair = jnp.where(row < batch, per_pair, 0.0)

    acc_ref[0, 0] += jnp.sum(per_pair)

    @pl.when(step == pl.num_programs(0) - 1)
    def _():
        out_ref[0, 0] = acc_ref[0, 0] / jnp.float32(batch)


def _pick_batch_tile(B, D, itemsize):
    # Keep 2 inputs x 2 double-buffers of (TB, D) under ~12 MiB so the default
    # scoped-VMEM limit is respected on v5e/v6e/v7x without flag hacks.
    budget = 12 * 1024 * 1024
    tb = budget // (4 * max(D, 1) * itemsize)
    tb = max(8, (tb // 8) * 8)
    tb = min(tb, 2048)            # past ~1-2k rows the 0.35 us/step is amortized
    if tb >= B:
        return B                  # single tile == full array (always legal)
    return tb


def contrastive_loss(output1, output2, label, *, margin=2.0, eps=1e-6,
                     tile_batch=None):
    """output1, output2: (B, D); label: (B, 1). Returns scalar f32 loss."""
    B, D = output1.shape
    assert output2.shape == (B, D)
    assert label.shape == (B, 1)

    itemsize = jnp.dtype(output1.dtype).itemsize
    TB = tile_batch if tile_batch is not None else _pick_batch_tile(B, D, itemsize)
    num_tiles = (B + TB - 1) // TB

    kernel = functools.partial(
        _contrastive_loss_kernel,
        margin=float(margin), eps=float(eps), batch=B, tile=TB,
    )

    out = pl.pallas_call(
        kernel,
        out_shape=jax.ShapeDtypeStruct((1, 1), jnp.float32),
        grid=(num_tiles,),
        in_specs=[
            pl.BlockSpec((TB, D), lambda i: (i, 0)),   # o1 tile
            pl.BlockSpec((TB, D), lambda i: (i, 0)),   # o2 tile
            pl.BlockSpec((TB, 1), lambda i: (i, 0)),   # label tile
        ],
        out_specs=pl.BlockSpec(memory_space=pltpu.MemorySpace.SMEM),
        scratch_shapes=[pltpu.SMEM((1, 1), jnp.float32)],
        compiler_params=pltpu.CompilerParams(
            dimension_semantics=("arbitrary",),   # reduction into one accumulator
        ),
    )(output1, output2, label)
    return out[0, 0]


def _reference_loss(o1, o2, label, margin=2.0, eps=1e-6):
    diff = o1.astype(jnp.float32) - o2.astype(jnp.float32) + eps
    dist = jnp.sqrt(jnp.sum(diff * diff, axis=-1, keepdims=True))
    lbl = label.astype(jnp.float32)
    return jnp.mean((1.0 - lbl) * dist**2 + lbl * jnp.maximum(margin - dist, 0.0) ** 2)


if __name__ == "__main__":
    key = jax.random.PRNGKey(0)
    k1, k2, k3, k4, k5, k6 = jax.random.split(key, 6)

    # Small demo consistent with the module: embedding pairs + binary labels.
    B, D = 8, 32
    output1 = jax.random.normal(k1, (B, D), dtype=jnp.float32)
    output2 = jax.random.normal(k2, (B, D), dtype=jnp.float32)
    label = jax.random.bernoulli(k3, p=0.5, shape=(B, 1)).astype(jnp.float32)

    loss = jax.block_until_ready(contrastive_loss(output1, output2, label, margin=2.0))
    ref = jax.block_until_ready(_reference_loss(output1, output2, label, margin=2.0))
    assert jnp.allclose(loss, ref, atol=1e-5, rtol=1e-5), (loss, ref)

    # Exercise the tiled / accumulator / padded-last-tile path explicitly.
    B2, D2, TB2 = 40, 32, 16   # 3 tiles, last one partial
    o1b = jax.random.normal(k4, (B2, D2), dtype=jnp.float32)
    o2b = jax.random.normal(k5, (B2, D2), dtype=jnp.float32)
    lblb = jax.random.bernoulli(k6, p=0.5, shape=(B2, 1)).astype(jnp.float32)

    loss2 = jax.block_until_ready(
        contrastive_loss(o1b, o2b, lblb, margin=2.0, tile_batch=TB2)
    )
    ref2 = jax.block_until_ready(_reference_loss(o1b, o2b, lblb, margin=2.0))
    assert jnp.allclose(loss2, ref2, atol=1e-5, rtol=1e-5), (loss2, ref2)

    print("KERNEL_OK")
</pallas_src>

<mosaic_0001>
module attributes {stable_mosaic.version = 11 : i64} {
  func.func @_contrastive_loss_kernel(%arg0: i32, %arg1: memref<8x32xf32, #tpu.memory_space<vmem>>, %arg2: memref<8x32xf32, #tpu.memory_space<vmem>>, %arg3: memref<8x1xf32, #tpu.memory_space<vmem>>, %arg4: memref<1x1xf32, #tpu.memory_space<smem>>, %arg5: memref<1x1xf32, #tpu.memory_space<smem>>) attributes {dimension_semantics = [#tpu.dimension_semantics<arbitrary>], iteration_bounds = array<i64: 1>, scalar_prefetch = 0 : i64, scratch_operands = 1 : i64, tpu.core_type = #tpu.core_type<tc>, window_params = [{transform_indices = @transform_0, window_bounds = array<i64: 8, 32>}, {transform_indices = @transform_1, window_bounds = array<i64: 8, 32>}, {transform_indices = @transform_2, window_bounds = array<i64: 8, 1>}, {transform_indices = @transform_3, window_bounds = array<i64: 1, 1>}]} {
    %c0_i32 = arith.constant 0 : i32
    %0 = arith.cmpi eq, %arg0, %c0_i32 : i32
    %1 = arith.extui %0 : i1 to i32
    %c0_i32_0 = arith.constant 0 : i32
    %2 = arith.cmpi ne, %1, %c0_i32_0 : i32
    scf.if %2 {
      %cst_17 = arith.constant 0.000000e+00 : f32
      %c0_18 = arith.constant 0 : index
      %c0_19 = arith.constant 0 : index
      %33 = memref.load %arg5[%c0_18, %c0_19] : memref<1x1xf32, #tpu.memory_space<smem>>
      memref.store %cst_17, %arg5[%c0_18, %c0_19] : memref<1x1xf32, #tpu.memory_space<smem>>
    } else {
    }
    %c0 = arith.constant 0 : index
    %c0_1 = arith.constant 0 : index
    %3 = vector.load %arg1[%c0, %c0_1] : memref<8x32xf32, #tpu.memory_space<vmem>>, vector<8x32xf32>
    %c0_2 = arith.constant 0 : index
    %c0_3 = arith.constant 0 : index
    %4 = vector.load %arg2[%c0_2, %c0_3] : memref<8x32xf32, #tpu.memory_space<vmem>>, vector<8x32xf32>
    %c0_4 = arith.constant 0 : index
    %c0_5 = arith.constant 0 : index
    %5 = vector.load %arg3[%c0_4, %c0_5] : memref<8x1xf32, #tpu.memory_space<vmem>>, vector<8x1xf32>
    %6 = arith.subf %3, %4 : vector<8x32xf32>
    %cst = arith.constant 9.99999997E-7 : f32
    %7 = vector.broadcast %cst : f32 to vector<8x32xf32>
    %8 = arith.addf %6, %7 : vector<8x32xf32>
    %9 = arith.mulf %8, %8 : vector<8x32xf32>
    %cst_6 = arith.constant dense<0.000000e+00> : vector<8xf32>
    %10 = vector.multi_reduction <add>, %9, %cst_6 [1] : vector<8x32xf32> to vector<8xf32>
    %11 = vector.shape_cast %10 : vector<8xf32> to vector<8x1xf32>
    %12 = math.sqrt %11 : vector<8x1xf32>
    %cst_7 = arith.constant 1.000000e+00 : f32
    %13 = vector.broadcast %cst_7 : f32 to vector<8x1xf32>
    %14 = arith.subf %13, %5 : vector<8x1xf32>
    %15 = arith.mulf %14, %11 : vector<8x1xf32>
    %cst_8 = arith.constant 2.000000e+00 : f32
    %16 = vector.broadcast %cst_8 : f32 to vector<8x1xf32>
    %17 = arith.subf %16, %12 : vector<8x1xf32>
    %cst_9 = arith.constant 0.000000e+00 : f32
    %18 = vector.broadcast %cst_9 : f32 to vector<8x1xf32>
    %19 = arith.maximumf %17, %18 : vector<8x1xf32>
    %20 = arith.mulf %19, %19 : vector<8x1xf32>
    %21 = arith.mulf %5, %20 : vector<8x1xf32>
    %22 = arith.addf %15, %21 : vector<8x1xf32>
    %c0_10 = arith.constant 0 : index
    %c0_11 = arith.constant 0 : index
    %23 = memref.load %arg5[%c0_10, %c0_11] : memref<1x1xf32, #tpu.memory_space<smem>>
    %24 = vector.shape_cast %22 : vector<8x1xf32> to vector<1x8x1xf32>
    %cst_12 = arith.constant dense<0.000000e+00> : vector<1xf32>
    %25 = vector.multi_reduction <add>, %24, %cst_12 [1, 2] : vector<1x8x1xf32> to vector<1xf32>
    %26 = vector.shape_cast %25 : vector<1xf32> to vector<1x1x1xf32>
    %27 = vector.extract %26[0, 0, 0] : f32 from vector<1x1x1xf32>
    %28 = arith.addf %23, %27 : f32
    %c0_13 = arith.constant 0 : index
    %c0_14 = arith.constant 0 : index
    %29 = memref.load %arg5[%c0_13, %c0_14] : memref<1x1xf32, #tpu.memory_space<smem>>
    memref.store %28, %arg5[%c0_13, %c0_14] : memref<1x1xf32, #tpu.memory_space<smem>>
    %c0_i32_15 = arith.constant 0 : i32
    %30 = arith.cmpi eq, %arg0, %c0_i32_15 : i32
    %31 = arith.extui %30 : i1 to i32
    %c0_i32_16 = arith.constant 0 : i32
    %32 = arith.cmpi ne, %31, %c0_i32_16 : i32
    scf.if %32 {
      %c0_17 = arith.constant 0 : index
      %c0_18 = arith.constant 0 : index
      %33 = memref.load %arg5[%c0_17, %c0_18] : memref<1x1xf32, #tpu.memory_space<smem>>
      %cst_19 = arith.constant 8.000000e+00 : f32
      %34 = arith.divf %33, %cst_19 : f32
      %c0_20 = arith.constant 0 : index
      %c0_21 = arith.constant 0 : index
      %35 = memref.load %arg4[%c0_20, %c0_21] : memref<1x1xf32, #tpu.memory_space<smem>>
      memref.store %34, %arg4[%c0_20, %c0_21] : memref<1x1xf32, #tpu.memory_space<smem>>
    } else {
    }
    return
  }
  func.func @transform_0(%arg0: i32) -> (i32, i32) {
    %c0_i32 = arith.constant 0 : i32
    %c0_i32_0 = arith.constant 0 : i32
    return %arg0, %c0_i32 : i32, i32
  }
  func.func @transform_1(%arg0: i32) -> (i32, i32) {
    %c0_i32 = arith.constant 0 : i32
    %c0_i32_0 = arith.constant 0 : i32
    return %arg0, %c0_i32 : i32, i32
  }
  func.func @transform_2(%arg0: i32) -> (i32, i32) {
    %c0_i32 = arith.constant 0 : i32
    %c0_i32_0 = arith.constant 0 : i32
    return %arg0, %c0_i32 : i32, i32
  }
  func.func @transform_3(%arg0: i32) -> (i32, i32) {
    %c0_i32 = arith.constant 0 : i32
    %c0_i32_0 = arith.constant 0 : i32
    %c0_i32_1 = arith.constant 0 : i32
    return %c0_i32, %c0_i32_0 : i32, i32
  }
}

</mosaic_0001>

<llo_original>
// kernel: tpu_custom_call.1
$region0: #{tpu_custom_call.1}
  #allocation0 [shape = 'u32[]', space=smem, size = 0x4, offset = 0x4, fixed_abs, tag = 'smem constant byte address 0x4 - core index']
  #allocation1 [shape = 'u32[144,128]{1,0:T(1,128)}', space=vmem, size = 0x12000, scoped, tag = 'internal scratch']
  #allocation2 [shape = 'f32[1,1]{1,0:T(1,128)}', space=smem, size = 0x200, scoped, tag = 'scratch operand']
  %s0 = inlined_call_operand.vmem [shape: f32[8,32], index: 0, kind: input, shape index: {}]
  %s1 = inlined_call_operand.hbm [shape: f32[8,32], index: 1, kind: input, shape index: {}]
  %s2 = inlined_call_operand.vmem [shape: f32[8,1], index: 2, kind: input, shape index: {}]
  %s3 = inlined_call_operand.hbm [shape: f32[1,1], index: 3, kind: output, shape index: {}]
  %s4 = sld [smem:[#allocation0]]
  $region34: #{tpu_custom_call.1} parent=0
    _
  %s6 = ssub.s32 1, %s4
  %s7 = scalar_select 0, %s6, %s4
  $region1: #{tpu_custom_call.1} parent=0
    #allocation3 [shape = 'u8[4096]{0}', space=vmem, size = 0x1000, scoped, tag = 'input window, operand 1, single buffered']
    #allocation4 [shape = 's32[1]{0}', space=sflag, size = 0x4, scoped, tag = 'scoped memory for tpu_custom_call.1']
    #allocation5 [shape = 's32[1]{0}', space=sflag, size = 0x4, scoped, tag = 'scoped memory for tpu_custom_call.1']
    #allocation6 [shape = 'u8[512]{0}', space=smem, size = 0x200, scoped, tag = 'output window, operand 0, single buffered']
    %8 = vsyncpa [#allocation4], 0
    %9 = vsyncpa [#allocation5], 0
    // Predicated region
    $region2: #{tpu_custom_call.1} parent=1 // pred_check
      _
    $region3: #{tpu_custom_call.1} parent=1 // pred_check_branch
      %11 = sbr.rel (0) target = $region5
    $region4: #{tpu_custom_call.1} parent=1 // pred_region
      _
    $region5: #{tpu_custom_call.1} parent=1 // pred_fallthru
      _
    // Predicated region
    $region6: #{tpu_custom_call.1} parent=1 // pred_check
      _
    $region7: #{tpu_custom_call.1} parent=1 // pred_check_branch
      %13 = sbr.rel (0) target = $region9
    $region8: #{tpu_custom_call.1} parent=1 // pred_region
      %s15 = ssub.s32 128, 128
      %16 = vsyncadd [#allocation4], %s15
      %s18 = sshll.u32 [#allocation3], 4
      %s19 = int_to_ptr.vmem [resolvable:$true] %s18
      %21 = dma.hbm_to_vmem [thread:$0]  %s1, 128, %s19, [#allocation4]
    $region9: #{tpu_custom_call.1} parent=1 // pred_fallthru
      _
    // Predicated region
    $region10: #{tpu_custom_call.1} parent=1 // pred_check
      _
    $region11: #{tpu_custom_call.1} parent=1 // pred_check_branch
      %23 = sbr.rel (0) target = $region13
    $region12: #{tpu_custom_call.1} parent=1 // pred_region
      _
    $region13: #{tpu_custom_call.1} parent=1 // pred_fallthru
      _
    // Predicated region
    $region14: #{tpu_custom_call.1} parent=1 // pred_check
      _
    $region15: #{tpu_custom_call.1} parent=1 // pred_check_branch
      %25 = sbr.rel (0) target = $region17
    $region16: #{tpu_custom_call.1} parent=1 // pred_region
      %26 = dma.done [#allocation4], 128
    $region17: #{tpu_custom_call.1} parent=1 // pred_fallthru
      _
    %p27 = scmp.eq.s32.totalorder 0, 0
    // Predicated region
    $region18: #{tpu_custom_call.1} parent=1 // pred_check
      %p28 = pneg %p27
    $region19: #{tpu_custom_call.1} parent=1 // pred_check_branch
      %30 = sbr.rel (%p28) target = $region21
    $region20: #{tpu_custom_call.1} parent=1 // pred_region
      %s31 = scalar_lea.smem [#allocation2], 0
      %32 = sst [smem:[%s31]] 0.0
    $region21: #{tpu_custom_call.1} parent=1 // pred_fallthru
      _
    %v33 = vld [vmem:[%s0] sm:$0xff]
    %v34 = vld [vmem:[#allocation3] sm:$0xff]
    %v35 = vld [vmem:[%s2] sm:$0xff]
    %v36 = vsub.f32 %v33, %v34
    %v37 = vadd.f32 %v36, 1e-06
    %v38 = vmul.f32 %v37, %v37
    %vm39 = vcmask 261120
    %v40 = vsel %vm39, %v38, 0.0
    %41 = vadd.xlane.f32.xlu0 %v40
    %v42 = vpop.xlane.xlu0 %41
    %v43 = vrsqrt.pop %v42
    %v44 = vmul.f32 %v42, %v43
    %vm45 = vcmp.eq.f32.partialorder %v42, inf
    %v46 = vsel %vm45, %v42, %v44
    %vm47 = vcmp.eq.f32.partialorder %v42, 0.0
    %v48 = vand.u32 %v42, 2147483648
    %v49 = vsel %vm47, %v48, %v46
    %v50 = vsub.f32 1.0, %v35
    %v51 = vmul.f32 %v50, %v42
    %v52 = vsub.f32 2.0, %v49
    %v53 = vmax.f32 %v52, 0.0
    %v54 = vmul.f32 %v53, %v53
    %v55 = vmul.f32 %v35, %v54
    %v56 = vadd.f32 %v51, %v55
    %s57 = sld [smem:[#allocation2]]
    %vm58 = vcmask 7168
    %v59 = vsel %vm58, %v56, 0.0
    %60 = vadd.xlane.f32.xlu0 %v59
    %v61 = vpop.xlane.xlu0 %60
    %v62 = vrot.slane %v61, 4
    %v63 = vadd.f32 %v61, %v62
    %v64 = vrot.slane %v63, 2
    %v65 = vadd.f32 %v63, %v64
    %v66 = vrot.slane %v65, 1
    %v67 = vadd.f32 %v65, %v66
    %s68 = vtos %v67
    %s69 = sadd.f32 %s57, %s68
    %s70 = scalar_lea.smem [#allocation2], 0
    %71 = sst [smem:[%s70]] %s69
    // Predicated region
    $region22: #{tpu_custom_call.1} parent=1 // pred_check
      %p72 = pneg %p27
    $region23: #{tpu_custom_call.1} parent=1 // pred_check_branch
      %74 = sbr.rel (%p72) target = $region25
    $region24: #{tpu_custom_call.1} parent=1 // pred_region
      %s75 = sld [smem:[#allocation2]]
      %v76 = vrcp.pop 8.0
      %s77 = vtos %v76
      %s78 = smul.f32 %s75, %s77
      %s79 = scalar_lea.smem [#allocation6], 0
      %80 = sst [smem:[%s79]] %s78
    $region25: #{tpu_custom_call.1} parent=1 // pred_fallthru
      _
    // Predicated region
    $region26: #{tpu_custom_call.1} parent=1 // pred_check
      _
    $region27: #{tpu_custom_call.1} parent=1 // pred_check_branch
      %82 = sbr.rel (0) target = $region29
    $region28: #{tpu_custom_call.1} parent=1 // pred_region
      %s84 = ssub.s32 16, 16
      %85 = vsyncadd [#allocation5], %s84
      %88 = dma.smem_to_hbm [#allocation6], 16, %s3, [#allocation5]
    $region29: #{tpu_custom_call.1} parent=1 // pred_fallthru
      _
    // Predicated region
    $region30: #{tpu_custom_call.1} parent=1 // pred_check
      _
    $region31: #{tpu_custom_call.1} parent=1 // pred_check_branch
      %90 = sbr.rel (0) target = $region33
    $region32: #{tpu_custom_call.1} parent=1 // pred_region
      %91 = dma.done [#allocation5], 16
    $region33: #{tpu_custom_call.1} parent=1 // pred_fallthru
      _
    %92 = sfence
    %93 = vsyncpa [#allocation4], 1
    %94 = vsyncpa [#allocation5], 1

</llo_original>
